<compile_context>
chip_gen: v6e
topology: v6e:2x2x1
jax: 0.10.0
libtpu: 0.0.40
codegen_flags: <defaults>
</compile_context>

<pallas_src>
import functools

import jax
import jax.numpy as jnp
from jax.experimental import pallas as pl
from jax.experimental.pallas import tpu as pltpu


def _channel_attention_kernel(x_ref, w1_ref, w2_ref, o_ref, acc_ref, *,
                              hw_total, hw_tile):
    # x_ref:   (1, C, hw_tile)  native dtype (f32 / bf16 / f16)
    # w1_ref:  (C_mid, C)       f32  (fc1 weight, original layout)
    # w2_ref:  (C, C_mid)       f32  (fc2 weight, original layout)
    # o_ref:   (1, C, 1)        output block for this batch element
    # acc_ref: (1, C, 1)        f32 VMEM accumulator (spatial partial sums)
    k = pl.program_id(1)
    nk = pl.num_programs(1)

    @pl.when(k == 0)
    def _():
        acc_ref[...] = jnp.zeros_like(acc_ref)

    # Cast tile to f32 on the VPU (required on v5e; keeps accumulation exact).
    xf = x_ref[...].astype(jnp.float32)  # (1, C, hw_tile)

    if hw_total % hw_tile != 0:
        # Ragged last tile: zero out padded lanes before the partial sum.
        lane = jax.lax.broadcasted_iota(jnp.int32, xf.shape, dimension=2)
        remaining = hw_total - k * hw_tile
        xf = jnp.where(lane < remaining, xf, 0.0)

    # Per-tile partial sum; keepdims keeps C on the sublane axis (no relayout).
    acc_ref[...] += jnp.sum(xf, axis=-1, keepdims=True)  # (1, C, 1)

    @pl.when(k == nk - 1)
    def _():
        # AdaptiveAvgPool2d(1): divide by the *true* spatial size.
        pooled = acc_ref[0] * jnp.float32(1.0 / hw_total)          # (C, 1)

        # fc1: 1x1 conv (no bias) == W1 @ pooled
        h = jnp.dot(w1_ref[...], pooled,
                    preferred_element_type=jnp.float32)            # (C_mid, 1)

        # Exact (erf-based) GELU, matching torch.nn.GELU() default.
        inv_sqrt2 = jnp.float32(0.7071067811865476)
        h = 0.5 * h * (1.0 + jax.lax.erf(h * inv_sqrt2))

        # fc2: 1x1 conv (no bias) == W2 @ h
        y = jnp.dot(w2_ref[...], h,
                    preferred_element_type=jnp.float32)             # (C, 1)

        # Sigmoid, single store per batch element.
        o_ref[0] = (1.0 / (1.0 + jnp.exp(-y))).astype(o_ref.dtype)


def _pick_hw_tile(hw, c, itemsize, budget_bytes=16 << 20):
    """Largest lane-dense spatial tile that fits a conservative VMEM budget."""
    if hw <= 4096:
        return hw  # full spatial extent in one block (always layout-legal)
    hw_padded = pl.cdiv(hw, 128) * 128
    max_elems = max(128, budget_bytes // (2 * c * itemsize))  # double-buffered
    tile = min(hw_padded, 8192, (max_elems // 128) * 128)
    return max(tile, 128)


def channel_attention(x_nchw, w_fc1, w_fc2, *, hw_tile=None):
    """x_nchw: (B, C, H, W); w_fc1: (C_mid, C, 1, 1); w_fc2: (C, C_mid, 1, 1).

    Returns (B, C, 1, 1), matching the PyTorch module.
    """
    B, C, H, W = x_nchw.shape
    C_mid = w_fc1.shape[0]
    HW = H * W

    # Keep x in its native dtype; the kernel casts each tile to f32.
    x_flat = x_nchw.reshape(B, C, HW)
    w1 = w_fc1.reshape(C_mid, C).astype(jnp.float32)   # (C_mid, C)
    w2 = w_fc2.reshape(C, C_mid).astype(jnp.float32)   # (C, C_mid)

    itemsize = jnp.dtype(x_flat.dtype).itemsize
    if hw_tile is None:
        hw_tile = _pick_hw_tile(HW, C, itemsize)
    n_k = pl.cdiv(HW, hw_tile)

    kernel = functools.partial(
        _channel_attention_kernel, hw_total=HW, hw_tile=hw_tile)

    # Rough VMEM need: double-buffered x tile + resident weights + scratch/out.
    x_tile_bytes = C * hw_tile * itemsize
    need = 2 * x_tile_bytes + (2 * C * C_mid + 3 * C) * 4
    vmem_limit = int(min(48 << 20, max(32 << 20, 2 * need)))

    out = pl.pallas_call(
        kernel,
        out_shape=jax.ShapeDtypeStruct((B, C, 1), x_nchw.dtype),
        grid_spec=pltpu.PrefetchScalarGridSpec(
            num_scalar_prefetch=0,
            grid=(B, n_k),
            in_specs=[
                pl.BlockSpec((1, C, hw_tile), lambda b, k: (b, 0, k)),
                pl.BlockSpec((C_mid, C), lambda b, k: (0, 0)),
                pl.BlockSpec((C, C_mid), lambda b, k: (0, 0)),
            ],
            out_specs=pl.BlockSpec((1, C, 1), lambda b, k: (b, 0, 0)),
            scratch_shapes=[pltpu.VMEM((1, C, 1), jnp.float32)],
        ),
        compiler_params=pltpu.CompilerParams(
            dimension_semantics=("parallel", "arbitrary"),
            vmem_limit_bytes=vmem_limit,
        ),
    )(x_flat, w1, w2)

    return out.reshape(B, C, 1, 1)


def _reference(x, w_fc1, w_fc2):
    B, C, H, W = x.shape
    C_mid = w_fc1.shape[0]
    pooled = jnp.mean(x.astype(jnp.float32), axis=(2, 3))       # (B, C)
    h = pooled @ w_fc1.reshape(C_mid, C).astype(jnp.float32).T  # (B, C_mid)
    h = 0.5 * h * (1.0 + jax.lax.erf(h / jnp.sqrt(2.0)))        # exact GELU
    y = h @ w_fc2.reshape(C, C_mid).astype(jnp.float32).T       # (B, C)
    return jax.nn.sigmoid(y).reshape(B, C, 1, 1).astype(x.dtype)


if __name__ == "__main__":
    key = jax.random.PRNGKey(0)
    kx, k1, k2, kx2, k3, k4 = jax.random.split(key, 6)

    # --- Case 1: small shapes consistent with the module (single spatial block)
    B, C, H, W = 2, 4, 16, 16
    ratio = 1
    C_mid = C // ratio

    x = jax.random.normal(kx, (B, C, H, W), dtype=jnp.float32)
    w_fc1 = 0.1 * jax.random.normal(k1, (C_mid, C, 1, 1), dtype=jnp.float32)
    w_fc2 = 0.1 * jax.random.normal(k2, (C, C_mid, 1, 1), dtype=jnp.float32)

    out = channel_attention(x, w_fc1, w_fc2)
    jax.block_until_ready(out)
    ref = _reference(x, w_fc1, w_fc2)
    assert out.shape == (B, C, 1, 1)
    assert jnp.allclose(out, ref, atol=1e-5, rtol=1e-5), "case1 mismatch"

    # --- Case 2: exercise the tiled/ragged spatial path (grid over HW + mask)
    B2, C2, H2, W2 = 2, 8, 15, 20   # HW = 300 -> 3 tiles of 128, last partial
    x2 = jax.random.normal(kx2, (B2, C2, H2, W2), dtype=jnp.float32)
    w1b = 0.1 * jax.random.normal(k3, (C2, C2, 1, 1), dtype=jnp.float32)
    w2b = 0.1 * jax.random.normal(k4, (C2, C2, 1, 1), dtype=jnp.float32)

    out2 = channel_attention(x2, w1b, w2b, hw_tile=128)
    jax.block_until_ready(out2)
    ref2 = _reference(x2, w1b, w2b)
    assert out2.shape == (B2, C2, 1, 1)
    assert jnp.allclose(out2, ref2, atol=1e-5, rtol=1e-5), "case2 mismatch"

    print("KERNEL_OK")
</pallas_src>

<mosaic_0001>
module attributes {stable_mosaic.version = 11 : i64} {
  func.func @_channel_attention_kernel(%arg0: i32, %arg1: i32, %arg2: memref<1x4x256xf32, #tpu.memory_space<vmem>>, %arg3: memref<4x4xf32, #tpu.memory_space<vmem>>, %arg4: memref<4x4xf32, #tpu.memory_space<vmem>>, %arg5: memref<1x4x1xf32, #tpu.memory_space<vmem>>, %arg6: memref<1x4x1xf32, #tpu.memory_space<vmem>>) attributes {dimension_semantics = [#tpu.dimension_semantics<parallel>, #tpu.dimension_semantics<arbitrary>], iteration_bounds = array<i64: 2, 1>, scalar_prefetch = 0 : i64, scratch_operands = 1 : i64, tpu.core_type = #tpu.core_type<tc>, window_params = [{transform_indices = @transform_0, window_bounds = array<i64: 1, 4, 256>}, {pipeline_mode = #tpu.pipeline_mode<synchronous>, transform_indices = @transform_1, window_bounds = array<i64: 4, 4>}, {pipeline_mode = #tpu.pipeline_mode<synchronous>, transform_indices = @transform_2, window_bounds = array<i64: 4, 4>}, {transform_indices = @transform_3, window_bounds = array<i64: 1, 4, 1>}]} {
    %c0_i32 = arith.constant 0 : i32
    %0 = arith.cmpi eq, %arg1, %c0_i32 : i32
    %1 = arith.extui %0 : i1 to i32
    %c0_i32_0 = arith.constant 0 : i32
    %2 = arith.cmpi ne, %1, %c0_i32_0 : i32
    scf.if %2 {
      %cst_11 = arith.constant 0.000000e+00 : f32
      %12 = vector.broadcast %cst_11 : f32 to vector<1x4x1xf32>
      %c0_12 = arith.constant 0 : index
      %c0_13 = arith.constant 0 : index
      %c0_14 = arith.constant 0 : index
      %13 = vector.load %arg6[%c0_12, %c0_13, %c0_14] : memref<1x4x1xf32, #tpu.memory_space<vmem>>, vector<1x4x1xf32>
      tpu.vector_store %arg6[%c0_12, %c0_13, %c0_14], %12 {strides = array<i32>} : memref<1x4x1xf32, #tpu.memory_space<vmem>>, vector<1x4x1xf32>,
    } else {
    }
    %c0 = arith.constant 0 : index
    %c0_1 = arith.constant 0 : index
    %c0_2 = arith.constant 0 : index
    %3 = vector.load %arg2[%c0, %c0_1, %c0_2] : memref<1x4x256xf32, #tpu.memory_space<vmem>>, vector<1x4x256xf32>
    %c0_3 = arith.constant 0 : index
    %c0_4 = arith.constant 0 : index
    %c0_5 = arith.constant 0 : index
    %4 = vector.load %arg6[%c0_3, %c0_4, %c0_5] : memref<1x4x1xf32, #tpu.memory_space<vmem>>, vector<1x4x1xf32>
    %cst = arith.constant dense<0.000000e+00> : vector<1x4xf32>
    %5 = vector.multi_reduction <add>, %3, %cst [2] : vector<1x4x256xf32> to vector<1x4xf32>
    %6 = vector.shape_cast %5 : vector<1x4xf32> to vector<1x4x1xf32>
    %7 = arith.addf %4, %6 : vector<1x4x1xf32>
    %c0_6 = arith.constant 0 : index
    %c0_7 = arith.constant 0 : index
    %c0_8 = arith.constant 0 : index
    %8 = vector.load %arg6[%c0_6, %c0_7, %c0_8] : memref<1x4x1xf32, #tpu.memory_space<vmem>>, vector<1x4x1xf32>
    tpu.vector_store %arg6[%c0_6, %c0_7, %c0_8], %7 {strides = array<i32>} : memref<1x4x1xf32, #tpu.memory_space<vmem>>, vector<1x4x1xf32>,
    %c0_i32_9 = arith.constant 0 : i32
    %9 = arith.cmpi eq, %arg1, %c0_i32_9 : i32
    %10 = arith.extui %9 : i1 to i32
    %c0_i32_10 = arith.constant 0 : i32
    %11 = arith.cmpi ne, %10, %c0_i32_10 : i32
    scf.if %11 {
      %c0_11 = arith.constant 0 : index
      %c0_12 = arith.constant 0 : index
      %c0_13 = arith.constant 0 : index
      %12 = vector.load %arg6[%c0_11, %c0_12, %c0_13] : memref<1x4x1xf32, #tpu.memory_space<vmem>>, vector<1x4x1xf32>
      %13 = vector.shape_cast %12 : vector<1x4x1xf32> to vector<4x1xf32>
      %cst_14 = arith.constant 3.906250e-03 : f32
      %14 = vector.broadcast %cst_14 : f32 to vector<4x1xf32>
      %15 = arith.mulf %13, %14 : vector<4x1xf32>
      %c0_15 = arith.constant 0 : index
      %c0_16 = arith.constant 0 : index
      %16 = vector.load %arg3[%c0_15, %c0_16] : memref<4x4xf32, #tpu.memory_space<vmem>>, vector<4x4xf32>
      %cst_17 = arith.constant dense<0.000000e+00> : vector<4x1xf32>
      %17 = tpu.matmul %16, %15, %cst_17 {dimension_numbers = #tpu.dot_dimension_numbers<[1], [0], [0], [1], [0, 0, 1, 1], [], []>} : vector<4x4xf32>, vector<4x1xf32>, vector<4x1xf32> -> vector<4x1xf32>
      %cst_18 = arith.constant 5.000000e-01 : f32
      %18 = vector.broadcast %cst_18 : f32 to vector<4x1xf32>
      %19 = arith.mulf %18, %17 : vector<4x1xf32>
      %cst_19 = arith.constant 0.707106769 : f32
      %20 = vector.broadcast %cst_19 : f32 to vector<4x1xf32>
      %21 = arith.mulf %17, %20 : vector<4x1xf32>
      %22 = math.erf %21 : vector<4x1xf32>
      %cst_20 = arith.constant 1.000000e+00 : f32
      %23 = vector.broadcast %cst_20 : f32 to vector<4x1xf32>
      %24 = arith.addf %23, %22 : vector<4x1xf32>
      %25 = arith.mulf %19, %24 : vector<4x1xf32>
      %c0_21 = arith.constant 0 : index
      %c0_22 = arith.constant 0 : index
      %26 = vector.load %arg4[%c0_21, %c0_22] : memref<4x4xf32, #tpu.memory_space<vmem>>, vector<4x4xf32>
      %cst_23 = arith.constant dense<0.000000e+00> : vector<4x1xf32>
      %27 = tpu.matmul %26, %25, %cst_23 {dimension_numbers = #tpu.dot_dimension_numbers<[1], [0], [0], [1], [0, 0, 1, 1], [], []>} : vector<4x4xf32>, vector<4x1xf32>, vector<4x1xf32> -> vector<4x1xf32>
      %cst_24 = arith.constant 0.000000e+00 : f32
      %28 = vector.broadcast %cst_24 : f32 to vector<4x1xf32>
      %29 = arith.subf %28, %27 : vector<4x1xf32>
      %30 = math.exp %29 : vector<4x1xf32>
      %cst_25 = arith.constant 1.000000e+00 : f32
      %31 = vector.broadcast %cst_25 : f32 to vector<4x1xf32>
      %32 = arith.addf %31, %30 : vector<4x1xf32>
      %cst_26 = arith.constant 1.000000e+00 : f32
      %33 = vector.broadcast %cst_26 : f32 to vector<4x1xf32>
      %34 = arith.divf %33, %32 : vector<4x1xf32>
      %c0_27 = arith.constant 0 : index
      %c0_28 = arith.constant 0 : index
      %c0_29 = arith.constant 0 : index
      %35 = vector.load %arg5[%c0_27, %c0_28, %c0_29] : memref<1x4x1xf32, #tpu.memory_space<vmem>>, vector<1x4x1xf32>
      %36 = vector.shape_cast %35 : vector<1x4x1xf32> to vector<4x1xf32>
      %37 = vector.shape_cast %34 : vector<4x1xf32> to vector<1x4x1xf32>
      tpu.vector_store %arg5[%c0_27, %c0_28, %c0_29], %37 {strides = array<i32>} : memref<1x4x1xf32, #tpu.memory_space<vmem>>, vector<1x4x1xf32>,
    } else {
    }
    return
  }
  func.func @transform_0(%arg0: i32, %arg1: i32) -> (i32, i32, i32) {
    %c0_i32 = arith.constant 0 : i32
    %c0_i32_0 = arith.constant 0 : i32
    return %arg0, %c0_i32, %arg1 : i32, i32, i32
  }
  func.func @transform_1(%arg0: i32, %arg1: i32) -> (i32, i32) {
    %c0_i32 = arith.constant 0 : i32
    %c0_i32_0 = arith.constant 0 : i32
    %c0_i32_1 = arith.constant 0 : i32
    return %c0_i32, %c0_i32_0 : i32, i32
  }
  func.func @transform_2(%arg0: i32, %arg1: i32) -> (i32, i32) {
    %c0_i32 = arith.constant 0 : i32
    %c0_i32_0 = arith.constant 0 : i32
    %c0_i32_1 = arith.constant 0 : i32
    return %c0_i32, %c0_i32_0 : i32, i32
  }
  func.func @transform_3(%arg0: i32, %arg1: i32) -> (i32, i32, i32) {
    %c0_i32 = arith.constant 0 : i32
    %c0_i32_0 = arith.constant 0 : i32
    %c0_i32_1 = arith.constant 0 : i32
    return %arg0, %c0_i32, %c0_i32_0 : i32, i32, i32
  }
}

</mosaic_0001>

<llo_original>
// kernel: tpu_custom_call.1
$region0: #{tpu_custom_call.1}
  #allocation0 [shape = 'u32[]', space=smem, size = 0x4, offset = 0x4, fixed_abs, tag = 'smem constant byte address 0x4 - core index']
  #allocation1 [shape = 'u32[144,128]{1,0:T(1,128)}', space=vmem, size = 0x12000, scoped, tag = 'internal scratch']
  #allocation2 [shape = 'f32[1,4,1]{2,1,0:T(4,128)}', space=vmem, size = 0x800, scoped, tag = 'scratch operand']
  %s0 = inlined_call_operand.hbm [shape: f32[2,4,256], index: 0, kind: input, shape index: {}]
  %s1 = inlined_call_operand.hbm [shape: f32[4,4], index: 1, kind: input, shape index: {}]
  %s2 = inlined_call_operand.hbm [shape: f32[4,4], index: 2, kind: input, shape index: {}]
  %s3 = inlined_call_operand.vmem [shape: f32[2,4,1], index: 3, kind: output, shape index: {}]
  %s4 = sld [smem:[#allocation0]]
  $region65: #{tpu_custom_call.1} parent=0
    _
  %s6 = ssub.s32 1, %s4
  %s7 = scalar_select 0, %s6, %s4
  $region1: #{tpu_custom_call.1} parent=0
    #allocation3 [shape = 'u8[8192]{0}', space=vmem, size = 0x2000, scoped, tag = 'input window, operand 0']
    #allocation4 [shape = 's32[2]{0}', space=sflag, size = 0x8, scoped, tag = 'scoped memory for tpu_custom_call.1']
    #allocation5 [shape = 'u8[2048]{0}', space=vmem, size = 0x800, scoped, tag = 'input window, operand 1, single buffered']
    #allocation6 [shape = 's32[1]{0}', space=sflag, size = 0x4, scoped, tag = 'scoped memory for tpu_custom_call.1']
    #allocation7 [shape = 'u8[2048]{0}', space=vmem, size = 0x800, scoped, tag = 'input window, operand 2, single buffered']
    %8 = vsyncpa [#allocation4], 0
    %s9 = scalar_lea.sflag [#allocation4], 1
    %10 = vsyncpa %s9, 0
    %11 = vsyncpa [#allocation6], 0
    loop: start=0, step=1, limit=4
    $region2: #{tpu_custom_call.1} parent=1 // loop_pre_header
      _
    $region3: #{tpu_custom_call.1} parent=1 // loop_header
      %s13 = sphi 0, %s17
      %p14 = scmp.ge.s32.totalorder %s13, 4
      %s20 = sphi 0, %s32
      %s21 = sphi 0, %s28
      %s22 = sphi 0, %s20
      %s23 = sphi 0, %s21
      %s24 = sphi 0, %s22
      %s25 = sphi 0, %s23
      %s37 = sphi 0, %s39
      %s40 = sphi 0, %s37
      %s41 = sphi 0, %s40
      %s57 = sphi 0, %s41
      %s61 = sphi 0, %s61
      %s63 = sphi 0, %s61
      %s64 = sphi 0, %s63
      %s78 = sphi 0, %s64
      %s82 = sphi 0, %s82
      %s84 = sphi 0, %s82
      %s85 = sphi 0, %s84
      %s99 = sphi 0, %s85
      %s105 = sphi 0, %s107
      %s108 = sphi 0, %s105
      %s109 = sphi 0, %s108
      %s125 = sphi 0, %s109
    $region4: #{tpu_custom_call.1} parent=1 // loop_header_branch
      %16 = sbr.rel (%p14) target = $region8
    $region5: #{tpu_custom_call.1} parent=1 // loop_body
      %s18 = ssub.s32 %s13, 1
      %s19 = ssub.s32 %s13, 2
      %s26 = sadd.s32 1, %s21
      %p27 = scmp.ge.s32.totalorder %s26, 1
      %s28 = scalar_select %p27, 0, %s26
      %s29 = sadd.s32 1, %s20
      %s30 = scalar_select %p27, %s29, %s20
      %p31 = scmp.ge.s32.totalorder %s30, 2
      %s32 = scalar_select %p31, 0, %s30
      %s33 = ssub.s32 %s20, %s32
      %s34 = ssub.s32 %s21, %s28
      %s35 = sor.u32 %s33, %s34
      %p36 = scmp.eq.s32.totalorder %s35, 0
      %s38 = sadd.s32 %s37, 1
      %s39 = scalar_select %p36, %s37, %s38
      %p42 = pneg %p36
      %p43 = scmp.eq.s32.totalorder %s13, 1
      %p44 = por %p42, %p43
      %p45 = scmp.ne.s32.totalorder %s37, %s40
      %p46 = scmp.eq.s32.totalorder %s13, 0
      %p47 = por %p45, %p46
      %p48 = scmp.ne.s32.totalorder %s37, %s40
      %p49 = scmp.eq.s32.totalorder %s18, 1
      %p50 = por %p48, %p49
      %p51 = scmp.ne.s32.totalorder %s40, %s41
      %p52 = scmp.eq.s32.totalorder %s18, 0
      %p53 = por %p51, %p52
      %p54 = scmp.ne.s32.totalorder %s40, %s41
      %p55 = scmp.eq.s32.totalorder %s19, 1
      %p56 = por %p54, %p55
      %p58 = scmp.ne.s32.totalorder %s41, %s57
      %p59 = scmp.eq.s32.totalorder %s19, 0
      %p60 = por %p58, %p59
      %s62 = sadd.s32 %s61, 1
      %p65 = scmp.eq.s32.totalorder %s13, 1
      %p66 = scmp.ne.s32.totalorder %s61, %s63
      %p67 = scmp.eq.s32.totalorder %s13, 0
      %p68 = por %p66, %p67
      %p69 = scmp.ne.s32.totalorder %s61, %s63
      %p70 = scmp.eq.s32.totalorder %s18, 1
      %p71 = por %p69, %p70
      %p72 = scmp.ne.s32.totalorder %s63, %s64
      %p73 = scmp.eq.s32.totalorder %s18, 0
      %p74 = por %p72, %p73
      %p75 = scmp.ne.s32.totalorder %s63, %s64
      %p76 = scmp.eq.s32.totalorder %s19, 1
      %p77 = por %p75, %p76
      %p79 = scmp.ne.s32.totalorder %s64, %s78
      %p80 = scmp.eq.s32.totalorder %s19, 0
      %p81 = por %p79, %p80
      %s83 = sadd.s32 %s82, 1
      %p86 = scmp.eq.s32.totalorder %s13, 1
      %p87 = scmp.ne.s32.totalorder %s82, %s84
      %p88 = scmp.eq.s32.totalorder %s13, 0
      %p89 = por %p87, %p88
      %p90 = scmp.ne.s32.totalorder %s82, %s84
      %p91 = scmp.eq.s32.totalorder %s18, 1
      %p92 = por %p90, %p91
      %p93 = scmp.ne.s32.totalorder %s84, %s85
      %p94 = scmp.eq.s32.totalorder %s18, 0
      %p95 = por %p93, %p94
      %p96 = scmp.ne.s32.totalorder %s84, %s85
      %p97 = scmp.eq.s32.totalorder %s19, 1
      %p98 = por %p96, %p97
      %p100 = scmp.ne.s32.totalorder %s85, %s99
      %p101 = scmp.eq.s32.totalorder %s19, 0
      %p102 = por %p100, %p101
      %s103 = ssub.s32 %s20, %s32
      %p104 = scmp.eq.s32.totalorder %s103, 0
      %s106 = sadd.s32 %s105, 1
      %s107 = scalar_select %p104, %s105, %s106
      %p110 = pneg %p104
      %p111 = scmp.eq.s32.totalorder %s13, 1
      %p112 = por %p110, %p111
      %p113 = scmp.ne.s32.totalorder %s105, %s108
      %p114 = scmp.eq.s32.totalorder %s13, 0
      %p115 = por %p113, %p114
      %p116 = scmp.ne.s32.totalorder %s105, %s108
      %p117 = scmp.eq.s32.totalorder %s18, 1
      %p118 = por %p116, %p117
      %p119 = scmp.ne.s32.totalorder %s108, %s109
      %p120 = scmp.eq.s32.totalorder %s18, 0
      %p121 = por %p119, %p120
      %p122 = scmp.ne.s32.totalorder %s108, %s109
      %p123 = scmp.eq.s32.totalorder %s19, 1
      %p124 = por %p122, %p123
      %p126 = scmp.ne.s32.totalorder %s109, %s125
      %p127 = scmp.eq.s32.totalorder %s19, 0
      %p128 = por %p126, %p127
      %p129 = scmp.le.s32.totalorder 1, %s13
      %p130 = scmp.lt.s32.totalorder %s13, 3
      %p131 = pnand %p129, %p130
      %p132 = pneg %p131
      // Predicated region
      $region9: #{tpu_custom_call.1} parent=5 // pred_check
        _
      $region10: #{tpu_custom_call.1} parent=5 // pred_check_branch
        %134 = sbr.rel (%p131) target = $region12
      $region11: #{tpu_custom_call.1} parent=5 // pred_region
        %s135 = ssub.s32 %s13, 1
        // Predicated region
        $region13: #{tpu_custom_call.1} parent=11 // pred_check
          %p136 = pneg %p74
        $region14: #{tpu_custom_call.1} parent=11 // pred_check_branch
          %138 = sbr.rel (%p136) target = $region16
        $region15: #{tpu_custom_call.1} parent=11 // pred_region
          %s140 = ssub.s32 64, 64
          %141 = vsyncadd [#allocation6], %s140
          %s143 = sshll.u32 [#allocation5], 4
          %s144 = int_to_ptr.vmem [resolvable:$true] %s143
          %146 = dma.hbm_to_vmem [thread:$0]  %s1, 64, %s144, [#allocation6]
        $region16: #{tpu_custom_call.1} parent=11 // pred_fallthru
          _
        // Predicated region
        $region17: #{tpu_custom_call.1} parent=11 // pred_check
          %p147 = pneg %p95
        $region18: #{tpu_custom_call.1} parent=11 // pred_check_branch
          %149 = sbr.rel (%p147) target = $region20
        $region19: #{tpu_custom_call.1} parent=11 // pred_region
          %s151 = ssub.s32 64, 64
          %152 = vsyncadd [#allocation6], %s151
          %s154 = sshll.u32 [#allocation7], 4
          %s155 = int_to_ptr.vmem [resolvable:$true] %s154
          %157 = dma.hbm_to_vmem [thread:$0]  %s2, 64, %s155, [#allocation6]
        $region20: #{tpu_custom_call.1} parent=11 // pred_fallthru
          _
      $region12: #{tpu_custom_call.1} parent=5 // pred_fallthru
        _
      %p158 = scmp.lt.s32.totalorder %s13, 2
      // Predicated region
      $region21: #{tpu_custom_call.1} parent=5 // pred_check
        %p159 = pneg %p158
      $region22: #{tpu_custom_call.1} parent=5 // pred_check_branch
        %161 = sbr.rel (%p159) target = $region24
      $region23: #{tpu_custom_call.1} parent=5 // pred_region
        // Predicated region
        $region25: #{tpu_custom_call.1} parent=23 // pred_check
          %p162 = pneg %p47
        $region26: #{tpu_custom_call.1} parent=23 // pred_check_branch
          %164 = sbr.rel (%p162) target = $region28
        $region27: #{tpu_custom_call.1} parent=23 // pred_region
          %s165 = sand.u32 %s37, 1
          %s166 = scalar_lea.sflag [#allocation4], %s165
          %s167 = sand.u32 %s37, 1
          %s168 = smul.addr %s167, 8
          %s169 = scalar_lea.vmem [#allocation3], %s168
          %s170 = smul.u32 2, %s21
          %s172 = ssub.s32 128, 128
          %173 = vsyncadd %s166, %s172
          %s174 = smul.addr %s20, 2
          %s175 = sadd.s32 %s170, %s174
          %s176 = smul.addr %s175, 64
          %s177 = scalar_lea.hbm %s0, %s176
          %s179 = sshll.u32 %s169, 4
          %s180 = int_to_ptr.vmem [resolvable:$true] %s179
          %182 = dma.hbm_to_vmem [thread:$0]  %s177, 128, %s180, %s166
        $region28: #{tpu_custom_call.1} parent=23 // pred_fallthru
          _
      $region24: #{tpu_custom_call.1} parent=5 // pred_fallthru
        _
      %p183 = scmp.le.s32.totalorder 1, %s13
      %p184 = scmp.lt.s32.totalorder %s13, 3
      %p185 = pnand %p183, %p184
      %p186 = pneg %p185
      // Predicated region
      $region29: #{tpu_custom_call.1} parent=5 // pred_check
        _
      $region30: #{tpu_custom_call.1} parent=5 // pred_check_branch
        %188 = sbr.rel (%p185) target = $region32
      $region31: #{tpu_custom_call.1} parent=5 // pred_region
        %s189 = ssub.s32 %s13, 1
        %s190 = sand.u32 %s40, 1
        %s191 = scalar_lea.sflag [#allocation4], %s190
        %s192 = sand.u32 %s40, 1
        %s193 = smul.addr %s192, 8
        %s194 = scalar_lea.vmem [#allocation3], %s193
        // Predicated region
        $region33: #{tpu_custom_call.1} parent=31 // pred_check
          %p195 = pneg %p53
        $region34: #{tpu_custom_call.1} parent=31 // pred_check_branch
          %197 = sbr.rel (%p195) target = $region36
        $region35: #{tpu_custom_call.1} parent=31 // pred_region
          %198 = dma.done %s191, 128
        $region36: #{tpu_custom_call.1} parent=31 // pred_fallthru
          _
        // Predicated region
        $region37: #{tpu_custom_call.1} parent=31 // pred_check
          %p199 = pneg %p74
        $region38: #{tpu_custom_call.1} parent=31 // pred_check_branch
          %201 = sbr.rel (%p199) target = $region40
        $region39: #{tpu_custom_call.1} parent=31 // pred_region
          %202 = dma.done [#allocation6], 64
        $region40: #{tpu_custom_call.1} parent=31 // pred_fallthru
          _
        // Predicated region
        $region41: #{tpu_custom_call.1} parent=31 // pred_check
          %p203 = pneg %p95
        $region42: #{tpu_custom_call.1} parent=31 // pred_check_branch
          %205 = sbr.rel (%p203) target = $region44
        $region43: #{tpu_custom_call.1} parent=31 // pred_region
          %206 = dma.done [#allocation6], 64
        $region44: #{tpu_custom_call.1} parent=31 // pred_fallthru
          _
        %s207 = sand.u32 %s40, 1
        %s208 = scalar_lea.sflag [#allocation4], %s207
        %s209 = sand.u32 %s40, 1
        %s210 = smul.addr %s209, 8
        %s211 = scalar_lea.vmem [#allocation3], %s210
        %p212 = pneg %p53
        %p213 = pneg %p50
        %p214 = pneg %p74
        %p215 = pneg %p71
        %p216 = pneg %p95
        %p217 = pneg %p92
        %p218 = pneg %p121
        %p219 = pneg %p118
        %p220 = scmp.lt.s32.totalorder %s22, 1
        %s221 = scalar_select %p220, %s22, 1
        %s222 = smul.addr %s221, 4
        %s223 = scalar_lea.vmem %s3, %s222
        %s224 = smul.u32 2, %s23
        %p225 = scmp.lt.s32.totalorder %s22, 1
        %s226 = scalar_select %p225, %s22, 1
        %s227 = smul.addr %s226, 4
        %s228 = scalar_lea.vmem %s3, %s227
        %p229 = scmp.eq.s32.totalorder %s23, 0
        // Predicated region
        $region45: #{tpu_custom_call.1} parent=31 // pred_check
          %p230 = pneg %p229
        $region46: #{tpu_custom_call.1} parent=31 // pred_check_branch
          %232 = sbr.rel (%p230) target = $region48
        $region47: #{tpu_custom_call.1} parent=31 // pred_region
          %vm233 = vcmask 3072
          %234 = vst.msk [vmem:[#allocation2] sm:$0xf] %vm233, 0.0
        $region48: #{tpu_custom_call.1} parent=31 // pred_fallthru
          _
        %v235 = vld [vmem:[%s194] sm:$0xff]
        %v236 = vld [vmem:[#allocation2] sm:$0xf]
        %v238 = vcombine.high %v235, %v235
        %vm240 = vcmask 1043456
        %v241 = vsel %vm240, %v235, 0.0
        %v242 = vsel %vm240, %v238, 0.0
        %v243 = vadd.f32 %v241, %v242
        %244 = vadd.xlane.f32.xlu0 %v243
        %v245 = vpop.xlane.xlu0 %244
        %v246 = vadd.f32 %v236, %v245
        %vm247 = vcmask 3072
        %248 = vst.msk [vmem:[#allocation2] sm:$0xf] %vm247, %v246
        // Predicated region
        $region49: #{tpu_custom_call.1} parent=31 // pred_check
          %p249 = pneg %p229
        $region50: #{tpu_custom_call.1} parent=31 // pred_check_branch
          %251 = sbr.rel (%p249) target = $region52
        $region51: #{tpu_custom_call.1} parent=31 // pred_region
          %v252 = vld [vmem:[#allocation2] sm:$0xf]
          %v253 = vmul.f32 %v252, 0.00390625
          %v254 = vld [vmem:[#allocation5] sm:$0xf]
          %vm255 = vcmask 31744
          %v257 = vsel %vm255, %v254, 0
          %v260 = vsel %vm240, %v253, 0
          %262 = vmatprep.subr.mxu0 0.0
          %263 = vmatpush1.msra.mxu0 0.0
          %264 = vmatprep.subr.mxu0 0.0
          %265 = vmatpush1.msra.mxu0 0.0
          %266 = vmatprep.subr.mxu0 0.0
          %267 = vmatpush1.msra.mxu0 0.0
          %268 = vmatprep.subr.mxu0 0.0
          %269 = vmatpush1.msra.mxu0 0.0
          %270 = vmatprep.subr.mxu0 0.0
          %271 = vmatpush1.msra.mxu0 0.0
          %272 = vmatprep.subr.mxu0 0.0
          %273 = vmatpush1.msra.mxu0 0.0
          %274 = vmatprep.subr.mxu0 0.0
          %275 = vmatpush1.msra.mxu0 0.0
          %276 = vmatprep.subr.mxu0 0.0
          %277 = vmatpush1.msra.mxu0 0.0
          %278 = vmatprep.subr.mxu0 0.0
          %279 = vmatpush1.msra.mxu0 0.0
          %280 = vmatprep.subr.mxu0 0.0
          %281 = vmatpush1.msra.mxu0 0.0
          %282 = vmatprep.subr.mxu0 0.0
          %283 = vmatpush1.msra.mxu0 0.0
          %284 = vmatprep.subr.mxu0 0.0
          %285 = vmatpush1.msra.mxu0 0.0
          %286 = vmatprep.subr.mxu0 0.0
          %287 = vmatpush1.msra.mxu0 0.0
          %288 = vmatprep.subr.mxu0 0.0
          %289 = vmatpush1.msra.mxu0 0.0
          %290 = vmatprep.subr.mxu0 0.0
          %291 = vmatpush1.msra.mxu0 0.0
          %292 = vmatprep.subr.mxu0 0.0
          %293 = vmatpush1.msra.mxu0 %v260
          %294 = vmatprep.subr.mxu0 0.0
          %295 = vmatpush2.msra.mxu0 0.0
          %296 = vmatprep.subr.mxu0 0.0
          %297 = vmatpush2.msra.mxu0 0.0
          %298 = vmatprep.subr.mxu0 0.0
          %299 = vmatpush2.msra.mxu0 0.0
          %300 = vmatprep.subr.mxu0 0.0
          %301 = vmatpush2.msra.mxu0 0.0
          %302 = vmatprep.subr.mxu0 0.0
          %303 = vmatpush2.msra.mxu0 0.0
          %304 = vmatprep.subr.mxu0 0.0
          %305 = vmatpush2.msra.mxu0 0.0
          %306 = vmatprep.subr.mxu0 0.0
          %307 = vmatpush2.msra.mxu0 0.0
          %308 = vmatprep.subr.mxu0 0.0
          %309 = vmatpush2.msra.mxu0 0.0
          %310 = vmatprep.subr.mxu0 0.0
          %311 = vmatpush2.msra.mxu0 0.0
          %312 = vmatprep.subr.mxu0 0.0
          %313 = vmatpush2.msra.mxu0 0.0
          %314 = vmatprep.subr.mxu0 0.0
          %315 = vmatpush2.msra.mxu0 0.0
          %316 = vmatprep.subr.mxu0 0.0
          %317 = vmatpush2.msra.mxu0 0.0
          %318 = vmatprep.subr.mxu0 0.0
          %319 = vmatpush2.msra.mxu0 0.0
          %320 = vmatprep.subr.mxu0 0.0
          %321 = vmatpush2.msra.mxu0 0.0
          %322 = vmatprep.subr.mxu0 0.0
          %323 = vmatpush2.msra.mxu0 0.0
          %324 = vmatprep.subr.mxu0 0.0
          %325 = vmatpush2.msra.mxu0 0.0
          %326 = vmatprep.mubr.f32.mxu0 0.0
          %327 = vmatmul.mubr.f32.gmra.mxu0 %v257
          %v328 = vpop.f32.mrf.mxu0
          %v329 = vadd.f32 0.0, %v328
          %v330 = vpop.f32.mrf.mxu0
          %331 = vdwg.mxu0
          %v332 = vmul.f32 %v329, 0.5
          %v333 = vmul.f32 %v329, 0.70710677
          %v334 = verf.f32.pop %v333
          %v335 = vadd.f32 %v334, 1.0
          %v336 = vmul.f32 %v332, %v335
          %v337 = vld [vmem:[#allocation7] sm:$0xf]
          %v339 = vsel %vm255, %v337, 0
          %v342 = vsel %vm240, %v336, 0
          %344 = vmatprep.subr.mxu0 0.0
          %345 = vmatpush1.msra.mxu0 0.0
          %346 = vmatprep.subr.mxu0 0.0
          %347 = vmatpush1.msra.mxu0 0.0
          %348 = vmatprep.subr.mxu0 0.0
          %349 = vmatpush1.msra.mxu0 0.0
          %350 = vmatprep.subr.mxu0 0.0
          %351 = vmatpush1.msra.mxu0 0.0
          %352 = vmatprep.subr.mxu0 0.0
          %353 = vmatpush1.msra.mxu0 0.0
          %354 = vmatprep.subr.mxu0 0.0
          %355 = vmatpush1.msra.mxu0 0.0
          %356 = vmatprep.subr.mxu0 0.0
          %357 = vmatpush1.msra.mxu0 0.0
          %358 = vmatprep.subr.mxu0 0.0
          %359 = vmatpush1.msra.mxu0 0.0
          %360 = vmatprep.subr.mxu0 0.0
          %361 = vmatpush1.msra.mxu0 0.0
          %362 = vmatprep.subr.mxu0 0.0
          %363 = vmatpush1.msra.mxu0 0.0
          %364 = vmatprep.subr.mxu0 0.0
          %365 = vmatpush1.msra.mxu0 0.0
          %366 = vmatprep.subr.mxu0 0.0
          %367 = vmatpush1.msra.mxu0 0.0
          %368 = vmatprep.subr.mxu0 0.0
          %369 = vmatpush1.msra.mxu0 0.0
          %370 = vmatprep.subr.mxu0 0.0
          %371 = vmatpush1.msra.mxu0 0.0
          %372 = vmatprep.subr.mxu0 0.0
          %373 = vmatpush1.msra.mxu0 0.0
          %374 = vmatprep.subr.mxu0 0.0
          %375 = vmatpush1.msra.mxu0 %v342
          %376 = vmatprep.subr.mxu0 0.0
          %377 = vmatpush2.msra.mxu0 0.0
          %378 = vmatprep.subr.mxu0 0.0
          %379 = vmatpush2.msra.mxu0 0.0
          %380 = vmatprep.subr.mxu0 0.0
          %381 = vmatpush2.msra.mxu0 0.0
          %382 = vmatprep.subr.mxu0 0.0
          %383 = vmatpush2.msra.mxu0 0.0
          %384 = vmatprep.subr.mxu0 0.0
          %385 = vmatpush2.msra.mxu0 0.0
          %386 = vmatprep.subr.mxu0 0.0
          %387 = vmatpush2.msra.mxu0 0.0
          %388 = vmatprep.subr.mxu0 0.0
          %389 = vmatpush2.msra.mxu0 0.0
          %390 = vmatprep.subr.mxu0 0.0
          %391 = vmatpush2.msra.mxu0 0.0
          %392 = vmatprep.subr.mxu0 0.0
          %393 = vmatpush2.msra.mxu0 0.0
          %394 = vmatprep.subr.mxu0 0.0
          %395 = vmatpush2.msra.mxu0 0.0
          %396 = vmatprep.subr.mxu0 0.0
          %397 = vmatpush2.msra.mxu0 0.0
          %398 = vmatprep.subr.mxu0 0.0
          %399 = vmatpush2.msra.mxu0 0.0
          %400 = vmatprep.subr.mxu0 0.0
          %401 = vmatpush2.msra.mxu0 0.0
          %402 = vmatprep.subr.mxu0 0.0
          %403 = vmatpush2.msra.mxu0 0.0
          %404 = vmatprep.subr.mxu0 0.0
          %405 = vmatpush2.msra.mxu0 0.0
          %406 = vmatprep.subr.mxu0 0.0
          %407 = vmatpush2.msra.mxu0 0.0
          %408 = vmatprep.mubr.f32.mxu0 0.0
          %409 = vmatmul.mubr.f32.gmra.mxu0 %v339
          %v410 = vpop.f32.mrf.mxu0
          %v411 = vadd.f32 0.0, %v410
          %v412 = vpop.f32.mrf.mxu0
          %413 = vdwg.mxu0
          %v414 = vsub.f32 0.0, %v411
          %v415 = vmul.f32 %v414, 1.442695
          %v416 = vpow.pop %v415
          %v417 = vadd.f32 %v416, 1.0
          %v418 = vrcp.pop %v417
          %v419 = vmul.f32 1.0, %v418
          %420 = vst.msk [vmem:[%s228] sm:$0xf] %vm247, %v419
        $region52: #{tpu_custom_call.1} parent=31 // pred_fallthru
          _
        %p421 = scmp.lt.s32.totalorder %s22, 1
        %s422 = scalar_select %p421, %s22, 1
        %s423 = smul.addr %s422, 4
        %s424 = scalar_lea.vmem %s3, %s423
        // Predicated region
        $region53: #{tpu_custom_call.1} parent=31 // pred_check
          %p425 = pneg %p118
        $region54: #{tpu_custom_call.1} parent=31 // pred_check_branch
          %427 = sbr.rel (%p425) target = $region56
        $region55: #{tpu_custom_call.1} parent=31 // pred_region
          _
        $region56: #{tpu_custom_call.1} parent=31 // pred_fallthru
          _
      $region32: #{tpu_custom_call.1} parent=5 // pred_fallthru
        _
      %p428 = scmp.le.s32.totalorder 2, %s13
      // Predicated region
      $region57: #{tpu_custom_call.1} parent=5 // pred_check
        %p429 = pneg %p428
      $region58: #{tpu_custom_call.1} parent=5 // pred_check_branch
        %431 = sbr.rel (%p429) target = $region60
      $region59: #{tpu_custom_call.1} parent=5 // pred_region
        %s432 = ssub.s32 %s13, 2
        // Predicated region
        $region61: #{tpu_custom_call.1} parent=59 // pred_check
          %p433 = pneg %p124
        $region62: #{tpu_custom_call.1} parent=59 // pred_check_branch
          %435 = sbr.rel (%p433) target = $region64
        $region63: #{tpu_custom_call.1} parent=59 // pred_region
          %p436 = scmp.lt.s32.totalorder %s24, 1
          %s437 = scalar_select %p436, %s24, 1
          %s438 = smul.addr %s437, 4
          %s439 = scalar_lea.vmem %s3, %s438
        $region64: #{tpu_custom_call.1} parent=59 // pred_fallthru
          _
      $region60: #{tpu_custom_call.1} parent=5 // pred_fallthru
        _
    $region6: #{tpu_custom_call.1} parent=1 // loop_footer
      %s17 = sadd.s32 1, %s13
    $region7: #{tpu_custom_call.1} parent=1 // loop_footer_branch
      %12 = sbr.rel target = $region3
    $region8: #{tpu_custom_call.1} parent=1 // loop_exit
      _
    %440 = vsyncpa [#allocation4], 1
    %s441 = scalar_lea.sflag [#allocation4], 1
    %442 = vsyncpa %s441, 1
    %443 = vsyncpa [#allocation6], 1

</llo_original>
